<compile_context>
chip_gen: v6e
topology: v6e:2x2x1
jax: 0.10.0
libtpu: 0.0.40
codegen_flags: <defaults>
</compile_context>

<pallas_src>
import functools

import jax
import jax.numpy as jnp
from jax.experimental import pallas as pl
from jax.experimental.pallas import tpu as pltpu

EPS = 1e-6
_LANES = 128
_MAX_TILE_ROWS = 512   # 512 * 128 = 64K pixels per tile (~2.25 MiB/buffer set f32)
_ACC_ROWS = 8


def _round_up(x, m):
    return ((x + m - 1) // m) * m


def _tile_losses(p_ref, l_ref, mode):
    """Per-pixel loss for one tile. Refs are (4, R, 128); returns (R, 128) f32."""
    p_l = p_ref[0].astype(jnp.float32)
    p_t = p_ref[1].astype(jnp.float32)
    p_r = p_ref[2].astype(jnp.float32)
    p_b = p_ref[3].astype(jnp.float32)
    l_l = l_ref[0].astype(jnp.float32)
    l_t = l_ref[1].astype(jnp.float32)
    l_r = l_ref[2].astype(jnp.float32)
    l_b = l_ref[3].astype(jnp.float32)

    # cat(...).min(dim=1) over {pred_c, label_c} == elementwise minimum
    i_left = jnp.minimum(p_l, l_l)
    i_right = jnp.minimum(p_r, l_r)
    i_top = jnp.minimum(p_t, l_t)
    i_bottom = jnp.minimum(p_b, l_b)

    i_area = jnp.maximum(i_right + i_left, 0.0) * jnp.maximum(i_bottom + i_top, 0.0)
    pred_area = (p_r + p_l) * (p_b + p_t)
    label_area = (l_r + l_l) * (l_b + l_t)
    u_area = pred_area + label_area - i_area
    iou = (i_area + 1.0) / (u_area + 1.0)

    if mode == 'iou':
        losses = -jnp.log(iou)
    elif mode == 'giou':
        e_left = jnp.maximum(p_l, l_l)
        e_right = jnp.maximum(p_r, l_r)
        e_top = jnp.maximum(p_t, l_t)
        e_bottom = jnp.maximum(p_b, l_b)
        enclose_area = (e_left + e_right) * (e_top + e_bottom)
        giou = iou - (enclose_area - u_area) / (enclose_area + EPS)
        losses = -jnp.log((giou + 1.0) / 2.0)
    else:
        raise ValueError('Unknown iou type: {}'.format(mode))
    return losses


def _fold(x):
    """(R, 128) -> (8, 128): sum vreg-aligned sublane groups (pure VPU adds)."""
    r = x.shape[0]
    return x.reshape(r // _ACC_ROWS, _ACC_ROWS, _LANES).sum(axis=0)


def _iou_loss_kernel(p_ref, l_ref, lsum_ref, acc_ref, *, mode):
    r = pl.program_id(1)

    @pl.when(r == 0)
    def _():
        acc_ref[...] = jnp.zeros_like(acc_ref)

    losses = _tile_losses(p_ref, l_ref, mode)          # (R, 128)
    acc_ref[...] += _fold(losses)                      # (8, 128)

    @pl.when(r == pl.num_programs(1) - 1)
    def _():
        lsum_ref[...] = acc_ref[...]


def _iou_loss_weighted_kernel(p_ref, l_ref, w_ref,
                              lsum_ref, wlsum_ref, wsum_ref,
                              lacc_ref, wlacc_ref, wacc_ref, *, mode):
    r = pl.program_id(1)

    @pl.when(r == 0)
    def _():
        lacc_ref[...] = jnp.zeros_like(lacc_ref)
        wlacc_ref[...] = jnp.zeros_like(wlacc_ref)
        wacc_ref[...] = jnp.zeros_like(wacc_ref)

    losses = _tile_losses(p_ref, l_ref, mode)          # (R, 128)
    w = w_ref[...].astype(jnp.float32)                 # (R, 128)
    lacc_ref[...] += _fold(losses)
    wlacc_ref[...] += _fold(losses * w)
    wacc_ref[...] += _fold(w)

    @pl.when(r == pl.num_programs(1) - 1)
    def _():
        lsum_ref[...] = lacc_ref[...]
        wlsum_ref[...] = wlacc_ref[...]
        wsum_ref[...] = wacc_ref[...]


def iou_loss(pred, label, weight=None, mode='iou', average_size=True):
    """Pallas implementation of IOULoss.forward. Returns a scalar f32."""
    del average_size  # unused in the PyTorch forward as well
    N, C, H, W = pred.shape
    assert C == 4, "pred/label must have 4 channels (l, t, r, b)"
    HW = H * W
    M = N * HW  # true element count for the unweighted mean

    # Pixel axis -> (rows, 128) lanes; rows padded so every tile is (R_TILE,128)
    # with R_TILE a multiple of 8.  Zero padding contributes exactly 0 loss.
    rows = -(-HW // _LANES)
    r_tile = min(_MAX_TILE_ROWS, _round_up(rows, _ACC_ROWS))
    rows_p = _round_up(rows, r_tile)
    HWp = rows_p * _LANES

    def prep_boxes(x):
        x = x.reshape(N, 4, HW)
        if HWp != HW:
            x = jnp.pad(x, ((0, 0), (0, 0), (0, HWp - HW)))
        return x.reshape(N, 4, rows_p, _LANES)

    p4 = prep_boxes(pred)
    l4 = prep_boxes(label)

    grid = (N, rows_p // r_tile)
    box_spec = pl.BlockSpec((None, 4, r_tile, _LANES), lambda n, r: (n, 0, r, 0))
    out_spec = pl.BlockSpec((None, _ACC_ROWS, _LANES), lambda n, r: (n, 0, 0))
    out_struct = jax.ShapeDtypeStruct((N, _ACC_ROWS, _LANES), jnp.float32)
    cparams = pltpu.CompilerParams(
        dimension_semantics=("parallel", "arbitrary"),
        vmem_limit_bytes=32 * 1024 * 1024,
    )

    if weight is None:
        partial = pl.pallas_call(
            functools.partial(_iou_loss_kernel, mode=mode),
            out_shape=out_struct,
            grid_spec=pltpu.PrefetchScalarGridSpec(
                num_scalar_prefetch=0,
                grid=grid,
                in_specs=[box_spec, box_spec],
                out_specs=out_spec,
                scratch_shapes=[pltpu.VMEM((_ACC_ROWS, _LANES), jnp.float32)],
            ),
            compiler_params=cparams,
        )(p4, l4)
        return jnp.sum(partial) / float(M)

    w2 = weight.reshape(N, HW)
    if HWp != HW:
        w2 = jnp.pad(w2, ((0, 0), (0, HWp - HW)))
    w2 = w2.reshape(N, rows_p, _LANES)
    w_spec = pl.BlockSpec((None, r_tile, _LANES), lambda n, r: (n, r, 0))

    lsum, wlsum, wsum_p = pl.pallas_call(
        functools.partial(_iou_loss_weighted_kernel, mode=mode),
        out_shape=(out_struct, out_struct, out_struct),
        grid_spec=pltpu.PrefetchScalarGridSpec(
            num_scalar_prefetch=0,
            grid=grid,
            in_specs=[box_spec, box_spec, w_spec],
            out_specs=(out_spec, out_spec, out_spec),
            scratch_shapes=[pltpu.VMEM((_ACC_ROWS, _LANES), jnp.float32)] * 3,
        ),
        compiler_params=cparams,
    )(p4, l4, w2)

    loss_sum = jnp.sum(lsum)
    wloss = jnp.sum(wlsum)
    wsum = jnp.sum(wsum_p)
    # torch: if weight is not None and weight.sum() > 0 -> weighted mean, else plain mean
    safe_wsum = jnp.where(wsum > 0.0, wsum, 1.0)   # avoid NaN on the dead branch
    return jnp.where(wsum > 0.0, wloss / safe_wsum, loss_sum / float(M))


# ---------------------------------------------------------------------------
# Pure-JAX reference (direct port of the PyTorch forward) for verification.
# ---------------------------------------------------------------------------
def iou_loss_ref(pred, label, weight=None, mode='iou'):
    p0, p1, p2_, p3 = pred[:, 0:1], pred[:, 1:2], pred[:, 2:3], pred[:, 3:4]
    l0, l1, l2_, l3 = label[:, 0:1], label[:, 1:2], label[:, 2:3], label[:, 3:4]
    i_l = jnp.minimum(p0, l0); i_r = jnp.minimum(p2_, l2_)
    i_t = jnp.minimum(p1, l1); i_b = jnp.minimum(p3, l3)
    i_area = jax.nn.relu(i_r + i_l) * jax.nn.relu(i_b + i_t)
    pred_area = (p2_ + p0) * (p3 + p1)
    label_area = (l2_ + l0) * (l3 + l1)
    u_area = pred_area + label_area - i_area
    iou = (i_area + 1.0) / (u_area + 1.0)
    if mode == 'iou':
        losses = -jnp.log(iou)
    else:
        e_l = jnp.maximum(p0, l0); e_r = jnp.maximum(p2_, l2_)
        e_t = jnp.maximum(p1, l1); e_b = jnp.maximum(p3, l3)
        enclose = (e_l + e_r) * (e_t + e_b)
        giou = iou - (enclose - u_area) / (enclose + EPS)
        losses = -jnp.log((giou + 1.0) / 2.0)
    if weight is not None and float(jnp.sum(weight)) > 0:
        return jnp.sum(losses * weight) / jnp.sum(weight)
    return jnp.mean(losses)


if __name__ == "__main__":
    key = jax.random.PRNGKey(0)
    k1, k2, k3 = jax.random.split(key, 3)
    N, C, H, W = 2, 4, 16, 16
    # positive ltrb distances so areas are positive and log is well-defined
    pred = jax.random.uniform(k1, (N, C, H, W), jnp.float32, 0.1, 1.0)
    label = jax.random.uniform(k2, (N, C, H, W), jnp.float32, 0.1, 1.0)
    weight = (jax.random.uniform(k3, (N, 1, H, W), jnp.float32) > 0.5).astype(jnp.float32)

    # iou mode, no weight
    out_iou = jax.block_until_ready(iou_loss(pred, label, mode='iou'))
    ref_iou = iou_loss_ref(pred, label, mode='iou')
    assert abs(float(out_iou) - float(ref_iou)) < 1e-5, (out_iou, ref_iou)

    # giou mode, no weight
    out_giou = jax.block_until_ready(iou_loss(pred, label, mode='giou'))
    ref_giou = iou_loss_ref(pred, label, mode='giou')
    assert abs(float(out_giou) - float(ref_giou)) < 1e-5, (out_giou, ref_giou)

    # iou mode, with weight
    out_w = jax.block_until_ready(iou_loss(pred, label, weight=weight, mode='iou'))
    ref_w = iou_loss_ref(pred, label, weight=weight, mode='iou')
    assert abs(float(out_w) - float(ref_w)) < 1e-5, (out_w, ref_w)

    # giou mode, with weight
    out_gw = jax.block_until_ready(iou_loss(pred, label, weight=weight, mode='giou'))
    ref_gw = iou_loss_ref(pred, label, weight=weight, mode='giou')
    assert abs(float(out_gw) - float(ref_gw)) < 1e-5, (out_gw, ref_gw)

    print("KERNEL_OK")
</pallas_src>

<mosaic_0001>
module attributes {stable_mosaic.version = 11 : i64} {
  func.func @_iou_loss_kernel(%arg0: i32, %arg1: i32, %arg2: memref<1x4x8x128xf32, #tpu.memory_space<vmem>>, %arg3: memref<1x4x8x128xf32, #tpu.memory_space<vmem>>, %arg4: memref<1x8x128xf32, #tpu.memory_space<vmem>>, %arg5: memref<8x128xf32, #tpu.memory_space<vmem>>) attributes {dimension_semantics = [#tpu.dimension_semantics<parallel>, #tpu.dimension_semantics<arbitrary>], iteration_bounds = array<i64: 2, 1>, scalar_prefetch = 0 : i64, scratch_operands = 1 : i64, tpu.core_type = #tpu.core_type<tc>, window_params = [{transform_indices = @transform_0, window_bounds = array<i64: 1, 4, 8, 128>}, {transform_indices = @transform_1, window_bounds = array<i64: 1, 4, 8, 128>}, {transform_indices = @transform_2, window_bounds = array<i64: 1, 8, 128>}]} {
    %c0_i32 = arith.constant 0 : i32
    %0 = arith.cmpi eq, %arg1, %c0_i32 : i32
    %1 = arith.extui %0 : i1 to i32
    %c0_i32_0 = arith.constant 0 : i32
    %2 = arith.cmpi ne, %1, %c0_i32_0 : i32
    scf.if %2 {
      %cst_40 = arith.constant 0.000000e+00 : f32
      %54 = vector.broadcast %cst_40 : f32 to vector<8x128xf32>
      %c0_41 = arith.constant 0 : index
      %c0_42 = arith.constant 0 : index
      %55 = vector.load %arg5[%c0_41, %c0_42] : memref<8x128xf32, #tpu.memory_space<vmem>>, vector<8x128xf32>
      tpu.vector_store %arg5[%c0_41, %c0_42], %54 {strides = array<i32>} : memref<8x128xf32, #tpu.memory_space<vmem>>, vector<8x128xf32>,
    } else {
    }
    %c0 = arith.constant 0 : index
    %c0_1 = arith.constant 0 : index
    %c0_2 = arith.constant 0 : index
    %c0_3 = arith.constant 0 : index
    %3 = vector.load %arg2[%c0, %c0_1, %c0_2, %c0_3] : memref<1x4x8x128xf32, #tpu.memory_space<vmem>>, vector<1x1x8x128xf32>
    %4 = vector.shape_cast %3 : vector<1x1x8x128xf32> to vector<8x128xf32>
    %c0_4 = arith.constant 0 : index
    %c1 = arith.constant 1 : index
    %c0_5 = arith.constant 0 : index
    %c0_6 = arith.constant 0 : index
    %5 = vector.load %arg2[%c0_4, %c1, %c0_5, %c0_6] : memref<1x4x8x128xf32, #tpu.memory_space<vmem>>, vector<1x1x8x128xf32>
    %6 = vector.shape_cast %5 : vector<1x1x8x128xf32> to vector<8x128xf32>
    %c0_7 = arith.constant 0 : index
    %c2 = arith.constant 2 : index
    %c0_8 = arith.constant 0 : index
    %c0_9 = arith.constant 0 : index
    %7 = vector.load %arg2[%c0_7, %c2, %c0_8, %c0_9] : memref<1x4x8x128xf32, #tpu.memory_space<vmem>>, vector<1x1x8x128xf32>
    %8 = vector.shape_cast %7 : vector<1x1x8x128xf32> to vector<8x128xf32>
    %c0_10 = arith.constant 0 : index
    %c3 = arith.constant 3 : index
    %c0_11 = arith.constant 0 : index
    %c0_12 = arith.constant 0 : index
    %9 = vector.load %arg2[%c0_10, %c3, %c0_11, %c0_12] : memref<1x4x8x128xf32, #tpu.memory_space<vmem>>, vector<1x1x8x128xf32>
    %10 = vector.shape_cast %9 : vector<1x1x8x128xf32> to vector<8x128xf32>
    %c0_13 = arith.constant 0 : index
    %c0_14 = arith.constant 0 : index
    %c0_15 = arith.constant 0 : index
    %c0_16 = arith.constant 0 : index
    %11 = vector.load %arg3[%c0_13, %c0_14, %c0_15, %c0_16] : memref<1x4x8x128xf32, #tpu.memory_space<vmem>>, vector<1x1x8x128xf32>
    %12 = vector.shape_cast %11 : vector<1x1x8x128xf32> to vector<8x128xf32>
    %c0_17 = arith.constant 0 : index
    %c1_18 = arith.constant 1 : index
    %c0_19 = arith.constant 0 : index
    %c0_20 = arith.constant 0 : index
    %13 = vector.load %arg3[%c0_17, %c1_18, %c0_19, %c0_20] : memref<1x4x8x128xf32, #tpu.memory_space<vmem>>, vector<1x1x8x128xf32>
    %14 = vector.shape_cast %13 : vector<1x1x8x128xf32> to vector<8x128xf32>
    %c0_21 = arith.constant 0 : index
    %c2_22 = arith.constant 2 : index
    %c0_23 = arith.constant 0 : index
    %c0_24 = arith.constant 0 : index
    %15 = vector.load %arg3[%c0_21, %c2_22, %c0_23, %c0_24] : memref<1x4x8x128xf32, #tpu.memory_space<vmem>>, vector<1x1x8x128xf32>
    %16 = vector.shape_cast %15 : vector<1x1x8x128xf32> to vector<8x128xf32>
    %c0_25 = arith.constant 0 : index
    %c3_26 = arith.constant 3 : index
    %c0_27 = arith.constant 0 : index
    %c0_28 = arith.constant 0 : index
    %17 = vector.load %arg3[%c0_25, %c3_26, %c0_27, %c0_28] : memref<1x4x8x128xf32, #tpu.memory_space<vmem>>, vector<1x1x8x128xf32>
    %18 = vector.shape_cast %17 : vector<1x1x8x128xf32> to vector<8x128xf32>
    %19 = arith.minimumf %4, %12 : vector<8x128xf32>
    %20 = arith.minimumf %8, %16 : vector<8x128xf32>
    %21 = arith.minimumf %6, %14 : vector<8x128xf32>
    %22 = arith.minimumf %10, %18 : vector<8x128xf32>
    %23 = arith.addf %20, %19 : vector<8x128xf32>
    %cst = arith.constant 0.000000e+00 : f32
    %24 = vector.broadcast %cst : f32 to vector<8x128xf32>
    %25 = arith.maximumf %23, %24 : vector<8x128xf32>
    %26 = arith.addf %22, %21 : vector<8x128xf32>
    %cst_29 = arith.constant 0.000000e+00 : f32
    %27 = vector.broadcast %cst_29 : f32 to vector<8x128xf32>
    %28 = arith.maximumf %26, %27 : vector<8x128xf32>
    %29 = arith.mulf %25, %28 : vector<8x128xf32>
    %30 = arith.addf %8, %4 : vector<8x128xf32>
    %31 = arith.addf %10, %6 : vector<8x128xf32>
    %32 = arith.mulf %30, %31 : vector<8x128xf32>
    %33 = arith.addf %16, %12 : vector<8x128xf32>
    %34 = arith.addf %18, %14 : vector<8x128xf32>
    %35 = arith.mulf %33, %34 : vector<8x128xf32>
    %36 = arith.addf %32, %35 : vector<8x128xf32>
    %37 = arith.subf %36, %29 : vector<8x128xf32>
    %cst_30 = arith.constant 1.000000e+00 : f32
    %38 = vector.broadcast %cst_30 : f32 to vector<8x128xf32>
    %39 = arith.addf %29, %38 : vector<8x128xf32>
    %cst_31 = arith.constant 1.000000e+00 : f32
    %40 = vector.broadcast %cst_31 : f32 to vector<8x128xf32>
    %41 = arith.addf %37, %40 : vector<8x128xf32>
    %42 = arith.divf %39, %41 : vector<8x128xf32>
    %43 = math.log %42 : vector<8x128xf32>
    %cst_32 = arith.constant 0.000000e+00 : f32
    %44 = vector.broadcast %cst_32 : f32 to vector<8x128xf32>
    %45 = arith.subf %44, %43 : vector<8x128xf32>
    %c0_33 = arith.constant 0 : index
    %c0_34 = arith.constant 0 : index
    %46 = vector.load %arg5[%c0_33, %c0_34] : memref<8x128xf32, #tpu.memory_space<vmem>>, vector<8x128xf32>
    %47 = vector.shape_cast %45 : vector<8x128xf32> to vector<1x8x128xf32>
    %cst_35 = arith.constant dense<0.000000e+00> : vector<8x128xf32>
    %48 = vector.multi_reduction <add>, %47, %cst_35 [0] : vector<1x8x128xf32> to vector<8x128xf32>
    %49 = arith.addf %46, %48 : vector<8x128xf32>
    %c0_36 = arith.constant 0 : index
    %c0_37 = arith.constant 0 : index
    %50 = vector.load %arg5[%c0_36, %c0_37] : memref<8x128xf32, #tpu.memory_space<vmem>>, vector<8x128xf32>
    tpu.vector_store %arg5[%c0_36, %c0_37], %49 {strides = array<i32>} : memref<8x128xf32, #tpu.memory_space<vmem>>, vector<8x128xf32>,
    %c0_i32_38 = arith.constant 0 : i32
    %51 = arith.cmpi eq, %arg1, %c0_i32_38 : i32
    %52 = arith.extui %51 : i1 to i32
    %c0_i32_39 = arith.constant 0 : i32
    %53 = arith.cmpi ne, %52, %c0_i32_39 : i32
    scf.if %53 {
      %c0_40 = arith.constant 0 : index
      %c0_41 = arith.constant 0 : index
      %54 = vector.load %arg5[%c0_40, %c0_41] : memref<8x128xf32, #tpu.memory_space<vmem>>, vector<8x128xf32>
      %c0_42 = arith.constant 0 : index
      %c0_43 = arith.constant 0 : index
      %c0_44 = arith.constant 0 : index
      %55 = vector.load %arg4[%c0_42, %c0_43, %c0_44] : memref<1x8x128xf32, #tpu.memory_space<vmem>>, vector<1x8x128xf32>
      %56 = vector.shape_cast %55 : vector<1x8x128xf32> to vector<8x128xf32>
      %57 = vector.shape_cast %54 : vector<8x128xf32> to vector<1x8x128xf32>
      tpu.vector_store %arg4[%c0_42, %c0_43, %c0_44], %57 {strides = array<i32>} : memref<1x8x128xf32, #tpu.memory_space<vmem>>, vector<1x8x128xf32>,
    } else {
    }
    return
  }
  func.func @transform_0(%arg0: i32, %arg1: i32) -> (i32, i32, i32, i32) {
    %c0_i32 = arith.constant 0 : i32
    %c0_i32_0 = arith.constant 0 : i32
    %c0_i32_1 = arith.constant 0 : i32
    return %arg0, %c0_i32, %arg1, %c0_i32_0 : i32, i32, i32, i32
  }
  func.func @transform_1(%arg0: i32, %arg1: i32) -> (i32, i32, i32, i32) {
    %c0_i32 = arith.constant 0 : i32
    %c0_i32_0 = arith.constant 0 : i32
    %c0_i32_1 = arith.constant 0 : i32
    return %arg0, %c0_i32, %arg1, %c0_i32_0 : i32, i32, i32, i32
  }
  func.func @transform_2(%arg0: i32, %arg1: i32) -> (i32, i32, i32) {
    %c0_i32 = arith.constant 0 : i32
    %c0_i32_0 = arith.constant 0 : i32
    %c0_i32_1 = arith.constant 0 : i32
    return %arg0, %c0_i32, %c0_i32_0 : i32, i32, i32
  }
}

</mosaic_0001>

<llo_original>
// kernel: tpu_custom_call.1
$region0: #{tpu_custom_call.1}
  #allocation0 [shape = 'u32[]', space=smem, size = 0x4, offset = 0x4, fixed_abs, tag = 'smem constant byte address 0x4 - core index']
  #allocation1 [shape = 'u32[144,128]{1,0:T(1,128)}', space=vmem, size = 0x12000, scoped, tag = 'internal scratch']
  #allocation2 [shape = 'f32[8,128]{1,0:T(8,128)}', space=vmem, size = 0x1000, scoped, tag = 'scratch operand']
  %s0 = inlined_call_operand.hbm [shape: f32[2,4,8,128], index: 0, kind: input, shape index: {}]
  %s1 = inlined_call_operand.hbm [shape: f32[2,4,8,128], index: 1, kind: input, shape index: {}]
  %s2 = inlined_call_operand.hbm [shape: f32[2,8,128], index: 2, kind: output, shape index: {}]
  %s3 = sld [smem:[#allocation0]]
  $region57: #{tpu_custom_call.1} parent=0
    _
  %s5 = ssub.s32 1, %s3
  %s6 = scalar_select 0, %s5, %s3
  $region1: #{tpu_custom_call.1} parent=0
    #allocation3 [shape = 'u8[32768]{0}', space=vmem, size = 0x8000, scoped, tag = 'input window, operand 0']
    #allocation4 [shape = 's32[2]{0}', space=sflag, size = 0x8, scoped, tag = 'scoped memory for tpu_custom_call.1']
    #allocation5 [shape = 's32[2]{0}', space=sflag, size = 0x8, scoped, tag = 'scoped memory for tpu_custom_call.1']
    #allocation6 [shape = 'u8[32768]{0}', space=vmem, size = 0x8000, scoped, tag = 'input window, operand 1']
    #allocation7 [shape = 's32[2]{0}', space=sflag, size = 0x8, scoped, tag = 'scoped memory for tpu_custom_call.1']
    #allocation8 [shape = 'u8[8192]{0}', space=vmem, size = 0x2000, scoped, tag = 'output window, operand 0']
    %7 = vsyncpa [#allocation4], 0
    %s8 = scalar_lea.sflag [#allocation4], 1
    %9 = vsyncpa %s8, 0
    %10 = vsyncpa [#allocation7], 0
    %s11 = scalar_lea.sflag [#allocation7], 1
    %12 = vsyncpa %s11, 0
    %13 = vsyncpa [#allocation5], 0
    %s14 = scalar_lea.sflag [#allocation5], 1
    %15 = vsyncpa %s14, 0
    loop: start=0, step=1, limit=4
    $region2: #{tpu_custom_call.1} parent=1 // loop_pre_header
      _
    $region3: #{tpu_custom_call.1} parent=1 // loop_header
      %s17 = sphi 0, %s21
      %p18 = scmp.ge.s32.totalorder %s17, 4
      %s24 = sphi 0, %s36
      %s25 = sphi 0, %s32
      %s26 = sphi 0, %s24
      %s27 = sphi 0, %s25
      %s28 = sphi 0, %s26
      %s29 = sphi 0, %s27
      %s41 = sphi 0, %s43
      %s44 = sphi 0, %s41
      %s45 = sphi 0, %s44
      %s61 = sphi 0, %s45
      %s69 = sphi 0, %s71
      %s72 = sphi 0, %s69
      %s73 = sphi 0, %s72
      %s89 = sphi 0, %s73
      %s95 = sphi 0, %s97
      %s98 = sphi 0, %s95
      %s99 = sphi 0, %s98
      %s115 = sphi 0, %s99
    $region4: #{tpu_custom_call.1} parent=1 // loop_header_branch
      %20 = sbr.rel (%p18) target = $region8
    $region5: #{tpu_custom_call.1} parent=1 // loop_body
      %s22 = ssub.s32 %s17, 1
      %s23 = ssub.s32 %s17, 2
      %s30 = sadd.s32 1, %s25
      %p31 = scmp.ge.s32.totalorder %s30, 1
      %s32 = scalar_select %p31, 0, %s30
      %s33 = sadd.s32 1, %s24
      %s34 = scalar_select %p31, %s33, %s24
      %p35 = scmp.ge.s32.totalorder %s34, 2
      %s36 = scalar_select %p35, 0, %s34
      %s37 = ssub.s32 %s24, %s36
      %s38 = ssub.s32 %s25, %s32
      %s39 = sor.u32 %s37, %s38
      %p40 = scmp.eq.s32.totalorder %s39, 0
      %s42 = sadd.s32 %s41, 1
      %s43 = scalar_select %p40, %s41, %s42
      %p46 = pneg %p40
      %p47 = scmp.eq.s32.totalorder %s17, 1
      %p48 = por %p46, %p47
      %p49 = scmp.ne.s32.totalorder %s41, %s44
      %p50 = scmp.eq.s32.totalorder %s17, 0
      %p51 = por %p49, %p50
      %p52 = scmp.ne.s32.totalorder %s41, %s44
      %p53 = scmp.eq.s32.totalorder %s22, 1
      %p54 = por %p52, %p53
      %p55 = scmp.ne.s32.totalorder %s44, %s45
      %p56 = scmp.eq.s32.totalorder %s22, 0
      %p57 = por %p55, %p56
      %p58 = scmp.ne.s32.totalorder %s44, %s45
      %p59 = scmp.eq.s32.totalorder %s23, 1
      %p60 = por %p58, %p59
      %p62 = scmp.ne.s32.totalorder %s45, %s61
      %p63 = scmp.eq.s32.totalorder %s23, 0
      %p64 = por %p62, %p63
      %s65 = ssub.s32 %s24, %s36
      %s66 = ssub.s32 %s25, %s32
      %s67 = sor.u32 %s65, %s66
      %p68 = scmp.eq.s32.totalorder %s67, 0
      %s70 = sadd.s32 %s69, 1
      %s71 = scalar_select %p68, %s69, %s70
      %p74 = pneg %p68
      %p75 = scmp.eq.s32.totalorder %s17, 1
      %p76 = por %p74, %p75
      %p77 = scmp.ne.s32.totalorder %s69, %s72
      %p78 = scmp.eq.s32.totalorder %s17, 0
      %p79 = por %p77, %p78
      %p80 = scmp.ne.s32.totalorder %s69, %s72
      %p81 = scmp.eq.s32.totalorder %s22, 1
      %p82 = por %p80, %p81
      %p83 = scmp.ne.s32.totalorder %s72, %s73
      %p84 = scmp.eq.s32.totalorder %s22, 0
      %p85 = por %p83, %p84
      %p86 = scmp.ne.s32.totalorder %s72, %s73
      %p87 = scmp.eq.s32.totalorder %s23, 1
      %p88 = por %p86, %p87
      %p90 = scmp.ne.s32.totalorder %s73, %s89
      %p91 = scmp.eq.s32.totalorder %s23, 0
      %p92 = por %p90, %p91
      %s93 = ssub.s32 %s24, %s36
      %p94 = scmp.eq.s32.totalorder %s93, 0
      %s96 = sadd.s32 %s95, 1
      %s97 = scalar_select %p94, %s95, %s96
      %p100 = pneg %p94
      %p101 = scmp.eq.s32.totalorder %s17, 1
      %p102 = por %p100, %p101
      %p103 = scmp.ne.s32.totalorder %s95, %s98
      %p104 = scmp.eq.s32.totalorder %s17, 0
      %p105 = por %p103, %p104
      %p106 = scmp.ne.s32.totalorder %s95, %s98
      %p107 = scmp.eq.s32.totalorder %s22, 1
      %p108 = por %p106, %p107
      %p109 = scmp.ne.s32.totalorder %s98, %s99
      %p110 = scmp.eq.s32.totalorder %s22, 0
      %p111 = por %p109, %p110
      %p112 = scmp.ne.s32.totalorder %s98, %s99
      %p113 = scmp.eq.s32.totalorder %s23, 1
      %p114 = por %p112, %p113
      %p116 = scmp.ne.s32.totalorder %s99, %s115
      %p117 = scmp.eq.s32.totalorder %s23, 0
      %p118 = por %p116, %p117
      %p119 = scmp.le.s32.totalorder 1, %s17
      %p120 = scmp.lt.s32.totalorder %s17, 3
      %p121 = pnand %p119, %p120
      %p122 = pneg %p121
      // Predicated region
      $region9: #{tpu_custom_call.1} parent=5 // pred_check
        _
      $region10: #{tpu_custom_call.1} parent=5 // pred_check_branch
        %124 = sbr.rel (%p121) target = $region12
      $region11: #{tpu_custom_call.1} parent=5 // pred_region
        %s125 = ssub.s32 %s17, 1
      $region12: #{tpu_custom_call.1} parent=5 // pred_fallthru
        _
      %p126 = scmp.lt.s32.totalorder %s17, 2
      // Predicated region
      $region13: #{tpu_custom_call.1} parent=5 // pred_check
        %p127 = pneg %p126
      $region14: #{tpu_custom_call.1} parent=5 // pred_check_branch
        %129 = sbr.rel (%p127) target = $region16
      $region15: #{tpu_custom_call.1} parent=5 // pred_region
        // Predicated region
        $region17: #{tpu_custom_call.1} parent=15 // pred_check
          %p130 = pneg %p51
        $region18: #{tpu_custom_call.1} parent=15 // pred_check_branch
          %132 = sbr.rel (%p130) target = $region20
        $region19: #{tpu_custom_call.1} parent=15 // pred_region
          %s133 = sand.u32 %s41, 1
          %s134 = scalar_lea.sflag [#allocation4], %s133
          %s135 = sand.u32 %s41, 1
          %s136 = smul.addr %s135, 32
          %s137 = scalar_lea.vmem [#allocation3], %s136
          %s139 = ssub.s32 512, 512
          %140 = vsyncadd %s134, %s139
          %s141 = smul.addr %s24, 4
          %s142 = sadd.s32 %s25, %s141
          %s143 = smul.addr %s142, 128
          %s144 = scalar_lea.hbm %s0, %s143
          %s145 = sshll.u32 %s137, 4
          %s146 = int_to_ptr.vmem [resolvable:$true] %s145
          %151 = dma.hbm_to_vmem [thread:$0]  %s144, 512, %s146, %s134, 128, 128, 8
        $region20: #{tpu_custom_call.1} parent=15 // pred_fallthru
          _
        // Predicated region
        $region21: #{tpu_custom_call.1} parent=15 // pred_check
          %p152 = pneg %p79
        $region22: #{tpu_custom_call.1} parent=15 // pred_check_branch
          %154 = sbr.rel (%p152) target = $region24
        $region23: #{tpu_custom_call.1} parent=15 // pred_region
          %s155 = sand.u32 %s69, 1
          %s156 = scalar_lea.sflag [#allocation7], %s155
          %s157 = sand.u32 %s69, 1
          %s158 = smul.addr %s157, 32
          %s159 = scalar_lea.vmem [#allocation6], %s158
          %s161 = ssub.s32 512, 512
          %162 = vsyncadd %s156, %s161
          %s163 = smul.addr %s24, 4
          %s164 = sadd.s32 %s25, %s163
          %s165 = smul.addr %s164, 128
          %s166 = scalar_lea.hbm %s1, %s165
          %s167 = sshll.u32 %s159, 4
          %s168 = int_to_ptr.vmem [resolvable:$true] %s167
          %173 = dma.hbm_to_vmem [thread:$0]  %s166, 512, %s168, %s156, 128, 128, 8
        $region24: #{tpu_custom_call.1} parent=15 // pred_fallthru
          _
      $region16: #{tpu_custom_call.1} parent=5 // pred_fallthru
        _
      %p174 = scmp.le.s32.totalorder 1, %s17
      %p175 = scmp.lt.s32.totalorder %s17, 3
      %p176 = pnand %p174, %p175
      %p177 = pneg %p176
      // Predicated region
      $region25: #{tpu_custom_call.1} parent=5 // pred_check
        _
      $region26: #{tpu_custom_call.1} parent=5 // pred_check_branch
        %179 = sbr.rel (%p176) target = $region28
      $region27: #{tpu_custom_call.1} parent=5 // pred_region
        %s180 = ssub.s32 %s17, 1
        %s181 = sand.u32 %s44, 1
        %s182 = scalar_lea.sflag [#allocation4], %s181
        %s183 = sand.u32 %s44, 1
        %s184 = smul.addr %s183, 32
        %s185 = scalar_lea.vmem [#allocation3], %s184
        // Predicated region
        $region29: #{tpu_custom_call.1} parent=27 // pred_check
          %p186 = pneg %p57
        $region30: #{tpu_custom_call.1} parent=27 // pred_check_branch
          %188 = sbr.rel (%p186) target = $region32
        $region31: #{tpu_custom_call.1} parent=27 // pred_region
          %189 = dma.done %s182, 512
        $region32: #{tpu_custom_call.1} parent=27 // pred_fallthru
          _
        %s190 = sand.u32 %s72, 1
        %s191 = scalar_lea.sflag [#allocation7], %s190
        %s192 = sand.u32 %s72, 1
        %s193 = smul.addr %s192, 32
        %s194 = scalar_lea.vmem [#allocation6], %s193
        // Predicated region
        $region33: #{tpu_custom_call.1} parent=27 // pred_check
          %p195 = pneg %p85
        $region34: #{tpu_custom_call.1} parent=27 // pred_check_branch
          %197 = sbr.rel (%p195) target = $region36
        $region35: #{tpu_custom_call.1} parent=27 // pred_region
          %198 = dma.done %s191, 512
        $region36: #{tpu_custom_call.1} parent=27 // pred_fallthru
          _
        %s199 = sand.u32 %s44, 1
        %s200 = scalar_lea.sflag [#allocation4], %s199
        %s201 = sand.u32 %s44, 1
        %s202 = smul.addr %s201, 32
        %s203 = scalar_lea.vmem [#allocation3], %s202
        %p204 = pneg %p57
        %p205 = pneg %p54
        %s206 = sand.u32 %s72, 1
        %s207 = scalar_lea.sflag [#allocation7], %s206
        %s208 = sand.u32 %s72, 1
        %s209 = smul.addr %s208, 32
        %s210 = scalar_lea.vmem [#allocation6], %s209
        %p211 = pneg %p85
        %p212 = pneg %p82
        %p213 = pneg %p111
        %p214 = pneg %p108
        %s215 = sand.u32 %s98, 1
        %s216 = scalar_lea.sflag [#allocation5], %s215
        %s217 = sand.u32 %s98, 1
        %s218 = smul.addr %s217, 8
        %s219 = scalar_lea.vmem [#allocation8], %s218
        %p220 = scmp.eq.s32.totalorder %s27, 0
        // Predicated region
        $region37: #{tpu_custom_call.1} parent=27 // pred_check
          %p221 = pneg %p220
        $region38: #{tpu_custom_call.1} parent=27 // pred_check_branch
          %223 = sbr.rel (%p221) target = $region40
        $region39: #{tpu_custom_call.1} parent=27 // pred_region
          %224 = vst [vmem:[#allocation2] sm:$0xff] 0.0
        $region40: #{tpu_custom_call.1} parent=27 // pred_fallthru
          _
        %v225 = vld [vmem:[%s185] sm:$0xff]
        %s226 = scalar_lea.vmem %s185, 8 [#allocation3]
        %v227 = vld [vmem:[%s226] sm:$0xff]
        %s228 = scalar_lea.vmem %s185, 16 [#allocation3]
        %v229 = vld [vmem:[%s228] sm:$0xff]
        %s230 = scalar_lea.vmem %s185, 24 [#allocation3]
        %v231 = vld [vmem:[%s230] sm:$0xff]
        %v232 = vld [vmem:[%s194] sm:$0xff]
        %s233 = scalar_lea.vmem %s194, 8 [#allocation6]
        %v234 = vld [vmem:[%s233] sm:$0xff]
        %s235 = scalar_lea.vmem %s194, 16 [#allocation6]
        %v236 = vld [vmem:[%s235] sm:$0xff]
        %s237 = scalar_lea.vmem %s194, 24 [#allocation6]
        %v238 = vld [vmem:[%s237] sm:$0xff]
        %v239 = vmin.f32 %v225, %v232
        %v240 = vmin.f32 %v229, %v236
        %v241 = vmin.f32 %v227, %v234
        %v242 = vmin.f32 %v231, %v238
        %v243 = vadd.f32 %v240, %v239
        %v244 = vmax.f32 %v243, 0.0
        %v245 = vadd.f32 %v242, %v241
        %v246 = vmax.f32 %v245, 0.0
        %v247 = vmul.f32 %v244, %v246
        %v248 = vadd.f32 %v229, %v225
        %v249 = vadd.f32 %v231, %v227
        %v250 = vmul.f32 %v248, %v249
        %v251 = vadd.f32 %v236, %v232
        %v252 = vadd.f32 %v238, %v234
        %v253 = vmul.f32 %v251, %v252
        %v254 = vadd.f32 %v250, %v253
        %v255 = vsub.f32 %v254, %v247
        %v256 = vadd.f32 %v247, 1.0
        %v257 = vadd.f32 %v255, 1.0
        %v258 = vrcp.pop %v257
        %v259 = vmul.f32 %v256, %v258
        %v260 = vlog2.pop %v259
        %v261 = vmul.f32 %v260, 0.6931472
        %v262 = vsub.f32 0.0, %v261
        %v263 = vld [vmem:[#allocation2] sm:$0xff]
        %v264 = vadd.f32 %v262, 0.0
        %v265 = vadd.f32 %v263, %v264
        %266 = vst [vmem:[#allocation2] sm:$0xff] %v265
        // Predicated region
        $region41: #{tpu_custom_call.1} parent=27 // pred_check
          %p267 = pneg %p220
        $region42: #{tpu_custom_call.1} parent=27 // pred_check_branch
          %269 = sbr.rel (%p267) target = $region44
        $region43: #{tpu_custom_call.1} parent=27 // pred_region
          %v270 = vld [vmem:[#allocation2] sm:$0xff]
          %271 = vst [vmem:[%s219] sm:$0xff] %v270
        $region44: #{tpu_custom_call.1} parent=27 // pred_fallthru
          _
        %s272 = sand.u32 %s98, 1
        %s273 = scalar_lea.sflag [#allocation5], %s272
        %s274 = sand.u32 %s98, 1
        %s275 = smul.addr %s274, 8
        %s276 = scalar_lea.vmem [#allocation8], %s275
        // Predicated region
        $region45: #{tpu_custom_call.1} parent=27 // pred_check
          %p277 = pneg %p108
        $region46: #{tpu_custom_call.1} parent=27 // pred_check_branch
          %279 = sbr.rel (%p277) target = $region48
        $region47: #{tpu_custom_call.1} parent=27 // pred_region
          %s281 = ssub.s32 128, 128
          %282 = vsyncadd %s273, %s281
          %s283 = smul.addr %s26, 128
          %s284 = scalar_lea.hbm %s2, %s283
          %s286 = sshll.u32 %s276, 4
          %s287 = int_to_ptr.vmem [resolvable:$true] %s286
          %289 = dma.vmem_to_hbm [thread:$0]  %s287, 128, %s284, %s273
        $region48: #{tpu_custom_call.1} parent=27 // pred_fallthru
          _
      $region28: #{tpu_custom_call.1} parent=5 // pred_fallthru
        _
      %p290 = scmp.le.s32.totalorder 2, %s17
      // Predicated region
      $region49: #{tpu_custom_call.1} parent=5 // pred_check
        %p291 = pneg %p290
      $region50: #{tpu_custom_call.1} parent=5 // pred_check_branch
        %293 = sbr.rel (%p291) target = $region52
      $region51: #{tpu_custom_call.1} parent=5 // pred_region
        %s294 = ssub.s32 %s17, 2
        // Predicated region
        $region53: #{tpu_custom_call.1} parent=51 // pred_check
          %p295 = pneg %p114
        $region54: #{tpu_custom_call.1} parent=51 // pred_check_branch
          %297 = sbr.rel (%p295) target = $region56
        $region55: #{tpu_custom_call.1} parent=51 // pred_region
          %s298 = sand.u32 %s99, 1
          %s299 = scalar_lea.sflag [#allocation5], %s298
          %s300 = sand.u32 %s99, 1
          %s301 = smul.addr %s300, 8
          %s302 = scalar_lea.vmem [#allocation8], %s301
          %303 = dma.done %s299, 128
        $region56: #{tpu_custom_call.1} parent=51 // pred_fallthru
          _
      $region52: #{tpu_custom_call.1} parent=5 // pred_fallthru
        _
    $region6: #{tpu_custom_call.1} parent=1 // loop_footer
      %s21 = sadd.s32 1, %s17
    $region7: #{tpu_custom_call.1} parent=1 // loop_footer_branch
      %16 = sbr.rel target = $region3
    $region8: #{tpu_custom_call.1} parent=1 // loop_exit
      _
    %304 = vsyncpa [#allocation4], 1
    %s305 = scalar_lea.sflag [#allocation4], 1
    %306 = vsyncpa %s305, 1
    %307 = vsyncpa [#allocation7], 1
    %s308 = scalar_lea.sflag [#allocation7], 1
    %309 = vsyncpa %s308, 1
    %310 = vsyncpa [#allocation5], 1
    %s311 = scalar_lea.sflag [#allocation5], 1
    %312 = vsyncpa %s311, 1

</llo_original>
